<compile_context>
chip_gen: v6e
topology: v6e:2x2x1
jax: 0.10.0
libtpu: 0.0.40
codegen_flags: <defaults>
</compile_context>

<pallas_src>
import jax
import jax.numpy as jnp
from jax import lax
from jax.experimental import pallas as pl
from jax.experimental.pallas import tpu as pltpu

BN_EPS = 1e-5  # torch.nn.BatchNorm1d default


# --------------------------------------------------------------------------- kernel

def fc_block_kernel(x_ref, w_ref, g_ref, beta_ref, o_ref, acc_ref):
    """One (feature-tile j, reduction-tile k) grid step.

    x_ref:    (B, tile_k)        activations
    w_ref:    (tile_k, tile_n)   weight, already (in, out) layout -> plain MXU feed
    g_ref:    (1, tile_n)        BatchNorm gamma
    beta_ref: (1, tile_n)        BatchNorm beta
    o_ref:    (B, tile_n)        output tile
    acc_ref:  (B, tile_n) f32    matmul accumulator (scratch, persists over k)
    """
    k = pl.program_id(1)

    @pl.when(k == 0)
    def _init():
        acc_ref[...] = jnp.zeros_like(acc_ref)

    # Canonical (M,K)x(K,N) contraction; no transpose anywhere near the MXU feed.
    acc_ref[...] += jnp.dot(x_ref[...], w_ref[...],
                            preferred_element_type=jnp.float32)

    @pl.when(k == pl.num_programs(1) - 1)
    def _finalize():
        y = acc_ref[...]  # (B, tile_n) f32; full batch -> BN stats are exact.

        # BatchNorm1d, training-mode batch statistics (biased variance), single pass.
        inv_b = jnp.float32(1.0 / y.shape[0])
        mean = jnp.sum(y, axis=0, keepdims=True) * inv_b
        ex2 = jnp.sum(y * y, axis=0, keepdims=True) * inv_b
        # Clamp: E[y^2] - mean^2 can go slightly negative in f32 (catastrophic
        # cancellation) and would NaN through rsqrt despite eps.
        var = jnp.maximum(ex2 - mean * mean, 0.0)

        scale = g_ref[...] * lax.rsqrt(var + BN_EPS)   # (1, tile_n)
        shift = beta_ref[...] - mean * scale           # (1, tile_n)
        z = y * scale + shift                          # one FMA per element

        # SiLU: z * sigmoid(z); the sigmoid goes to the EUP slot.
        o_ref[...] = (z * jax.nn.sigmoid(z)).astype(o_ref.dtype)


# --------------------------------------------------------------------------- sizing helpers

def _vmem_limit_bytes():
    """Generation-aware scoped-VMEM limit: 3/4 of physical, capped at 100 MiB.

    => ~48 MiB on v7x (64 MiB physical), 96 MiB on v5e/v6e (128 MiB physical).
    Falls back to a conservative 48 MiB if the hardware query is unavailable.
    """
    cap = 64 * 1024 * 1024
    try:
        info = pltpu.get_tpu_info()
        cap = int(getattr(info, "vmem_capacity_bytes", cap))
    except Exception:
        pass
    return int(min(cap * 3 // 4, 100 * 1024 * 1024))


def _pick_tile_k(in_f, max_tk=1024):
    """Largest multiple-of-128 divisor of in_f that is <= max_tk; else untiled K."""
    if in_f <= max_tk or in_f % 128 != 0:
        return in_f
    for tk in range((max_tk // 128) * 128, 0, -128):
        if in_f % tk == 0:
            return tk
    return in_f


def _pick_tile_n(B, tile_k, out_f, w_itemsize, out_itemsize, vmem_limit):
    """Feature-tile width: lane-dense divisors of out_f, sized to the VMEM budget.

    Prefers a 2-way split when it fits (one tile per v7x TensorCore; only one extra
    ~0.35 us grid step on 1-TC chips), otherwise the largest fitting tile -> minimal
    per-grid-step overhead, which dominates tiny matmuls.
    """
    cands = [out_f]
    t = out_f
    while t % 2 == 0 and (t // 2) % 128 == 0:
        t //= 2
        cands.append(t)
    for extra in (256, 128):
        if out_f % extra == 0 and extra not in cands:
            cands.append(extra)
    cands = sorted(set(cands), reverse=True)

    def step_bytes(tn):
        # Double-buffered weight / output / gamma / beta tiles, double-buffered x tile
        # (x needs two buffers whenever the K axis is tiled), plus the f32 accumulator.
        return (2 * (tile_k * tn * w_itemsize + B * tn * out_itemsize + 2 * tn * 4)
                + 2 * B * tile_k * 4
                + B * tn * 4)

    budget = int(0.6 * vmem_limit)  # leave headroom for Mosaic internal scratch
    fitting = [tn for tn in cands if step_bytes(tn) <= budget]
    if not fitting:
        return cands[-1]
    if len(fitting) >= 2 and fitting[0] == out_f and fitting[1] == out_f // 2:
        return fitting[1]          # 2-way split: megacore-friendly, near-minimal steps
    return fitting[0]


# --------------------------------------------------------------------------- wrapper

def fc_block(x, weight, bias, gamma, beta, *,
             weight_transposed=False, tile_n=None, tile_k=None,
             param_dtype=None, out_dtype=jnp.float32):
    """Forward of FC_block: SiLU(BatchNorm1d(Linear(x))) with batch statistics.

    x:      (B, in_features) float32
    weight: (out_features, in_features) PyTorch nn.Linear layout, or (in_features,
            out_features) if weight_transposed=True (preferred for persistent params:
            transpose once at setup, never per forward).
    bias:   (out_features,) accepted for API parity; mathematically cancelled by
            training-mode BatchNorm (must be folded into beta if eval-mode running
            statistics are ever used).
    gamma, beta: (out_features,) BatchNorm1d affine parameters.
    param_dtype: optional lower-precision dtype (e.g. jnp.bfloat16) for the x/weight MXU
                 stream; accumulation and BN/SiLU stay in float32.
    out_dtype:   output storage dtype (bf16 halves output HBM bytes when acceptable).
    """
    del bias  # A per-feature constant added before BatchNorm cancels in (y - mean).

    B, in_f = x.shape
    if weight_transposed:
        assert weight.shape[0] == in_f, "transposed weight must be (in_f, out_f)"
        w_t = weight
        out_f = weight.shape[1]
    else:
        out_f, in_f_w = weight.shape
        assert in_f_w == in_f
        # One-time layout change; for a reused parameter do this once at setup time
        # (pass weight_transposed=True) so no HBM transpose pass is paid per forward.
        w_t = jnp.transpose(weight)

    if param_dtype is not None:
        x = x.astype(param_dtype)
        w_t = w_t.astype(param_dtype)

    vmem_limit = _vmem_limit_bytes()

    if tile_k is None:
        tile_k = _pick_tile_k(in_f)
    assert in_f % tile_k == 0 and (tile_k == in_f or tile_k % 128 == 0)

    w_itemsize = jnp.dtype(w_t.dtype).itemsize
    o_itemsize = jnp.dtype(out_dtype).itemsize
    if tile_n is None:
        tile_n = _pick_tile_n(B, tile_k, out_f, w_itemsize, o_itemsize, vmem_limit)
    tile_n = min(tile_n, out_f)
    assert out_f % tile_n == 0, "out_features must be a multiple of tile_n"

    n_j = out_f // tile_n
    n_k = in_f // tile_k

    g2 = gamma.reshape(1, out_f).astype(jnp.float32)
    be2 = beta.reshape(1, out_f).astype(jnp.float32)

    x_itemsize = jnp.dtype(x.dtype).itemsize
    cost = pl.CostEstimate(
        flops=2 * B * in_f * out_f + 10 * B * out_f,
        transcendentals=B * out_f,                        # sigmoid exp
        bytes_accessed=(in_f * out_f * w_itemsize          # weight streamed exactly once
                        + n_j * B * in_f * x_itemsize      # x re-read per feature tile
                        + B * out_f * o_itemsize
                        + 2 * out_f * 4),
    )

    return pl.pallas_call(
        fc_block_kernel,
        out_shape=jax.ShapeDtypeStruct((B, out_f), out_dtype),
        grid_spec=pltpu.PrefetchScalarGridSpec(
            num_scalar_prefetch=0,
            grid=(n_j, n_k),                              # K innermost (reduction axis)
            in_specs=[
                # x: block index depends only on k -> DMA'd once per feature tile when
                # n_k == 1 (constant index), and bounded at (B, tile_k) when K is tiled.
                pl.BlockSpec((B, tile_k), lambda j, k: (0, k)),
                # weight streamed tile-by-tile in canonical (in, out) layout.
                pl.BlockSpec((tile_k, tile_n), lambda j, k: (k, j)),
                # gamma/beta: index constant across k -> one sub-KiB DMA per feature tile.
                pl.BlockSpec((1, tile_n), lambda j, k: (0, j)),
                pl.BlockSpec((1, tile_n), lambda j, k: (0, j)),
            ],
            out_specs=pl.BlockSpec((B, tile_n), lambda j, k: (0, j)),
            scratch_shapes=[pltpu.VMEM((B, tile_n), jnp.float32)],   # f32 accumulator
        ),
        compiler_params=pltpu.CompilerParams(
            dimension_semantics=("parallel", "arbitrary"),  # megacore split on feature axis
            vmem_limit_bytes=vmem_limit,
        ),
        cost_estimate=cost,
    )(x, w_t, g2, be2)


# --------------------------------------------------------------------------- reference

def fc_block_ref(x, weight, bias, gamma, beta):
    y = x @ weight.T + bias
    mean = jnp.mean(y, axis=0, keepdims=True)
    var = jnp.mean((y - mean) ** 2, axis=0, keepdims=True)
    z = (y - mean) / jnp.sqrt(var + BN_EPS) * gamma + beta
    return z * jax.nn.sigmoid(z)


# --------------------------------------------------------------------------- demo / checks

if __name__ == "__main__":
    # TODO(synk): BatchNorm1d running_mean/running_var buffer updates (training side
    # effect) are not emitted; only the forward activations are produced.

    key = jax.random.PRNGKey(0)

    # --- Test 1: base shape, PyTorch-layout weight, f32 path (n_k == 1). -------------
    B, in_features, out_features = 16, 64, 512
    kx, kw, kb, kg, kbe = jax.random.split(key, 5)
    x = jax.random.normal(kx, (B, in_features), dtype=jnp.float32)
    weight = jax.random.normal(kw, (out_features, in_features), dtype=jnp.float32) * 0.1
    bias = jax.random.normal(kb, (out_features,), dtype=jnp.float32) * 0.1
    gamma = 1.0 + 0.1 * jax.random.normal(kg, (out_features,), dtype=jnp.float32)
    beta = 0.1 * jax.random.normal(kbe, (out_features,), dtype=jnp.float32)

    out = jax.block_until_ready(fc_block(x, weight, bias, gamma, beta))
    ref = fc_block_ref(x, weight, bias, gamma, beta)
    assert out.shape == (B, out_features)
    assert jnp.allclose(out, ref, atol=2e-4, rtol=2e-4), "mismatch vs reference (test 1)"

    # --- Test 2: pre-transposed persistent weight + K-tiled accumulator path. --------
    in2, out2 = 256, 512
    k2x, k2w, k2b, k2g, k2be = jax.random.split(jax.random.PRNGKey(1), 5)
    x2 = jax.random.normal(k2x, (B, in2), dtype=jnp.float32)
    w2 = jax.random.normal(k2w, (out2, in2), dtype=jnp.float32) * 0.05
    b2 = jax.random.normal(k2b, (out2,), dtype=jnp.float32) * 0.1
    g2 = 1.0 + 0.1 * jax.random.normal(k2g, (out2,), dtype=jnp.float32)
    be2 = 0.1 * jax.random.normal(k2be, (out2,), dtype=jnp.float32)

    w2_t = jnp.transpose(w2)   # done ONCE outside the kernel (persistent parameter)
    out2_arr = jax.block_until_ready(
        fc_block(x2, w2_t, b2, g2, be2, weight_transposed=True, tile_k=128))
    ref2 = fc_block_ref(x2, w2, b2, g2, be2)
    assert out2_arr.shape == (B, out2)
    assert jnp.allclose(out2_arr, ref2, atol=5e-4, rtol=5e-4), "mismatch vs reference (test 2)"

    # --- Test 3: bf16 weight/x streaming + bf16 output (f32 accumulation / BN / SiLU). -
    out_bf = jax.block_until_ready(
        fc_block(x, weight, bias, gamma, beta,
                 param_dtype=jnp.bfloat16, out_dtype=jnp.bfloat16))
    out_bf32 = out_bf.astype(jnp.float32)
    assert out_bf.shape == (B, out_features)
    assert bool(jnp.isfinite(out_bf32).all())
    assert jnp.allclose(out_bf32, ref, atol=5e-2, rtol=5e-2), "mismatch vs reference (bf16)"

    print("KERNEL_OK")
</pallas_src>

<mosaic_0001>
module attributes {stable_mosaic.version = 11 : i64} {
  func.func @fc_block_kernel(%arg0: i32, %arg1: i32, %arg2: memref<16x64xf32, #tpu.memory_space<vmem>>, %arg3: memref<64x256xf32, #tpu.memory_space<vmem>>, %arg4: memref<1x256xf32, #tpu.memory_space<vmem>>, %arg5: memref<1x256xf32, #tpu.memory_space<vmem>>, %arg6: memref<16x256xf32, #tpu.memory_space<vmem>>, %arg7: memref<16x256xf32, #tpu.memory_space<vmem>>) attributes {dimension_semantics = [#tpu.dimension_semantics<parallel>, #tpu.dimension_semantics<arbitrary>], iteration_bounds = array<i64: 2, 1>, scalar_prefetch = 0 : i64, scratch_operands = 1 : i64, tpu.core_type = #tpu.core_type<tc>, window_params = [{transform_indices = @transform_0, window_bounds = array<i64: 16, 64>}, {transform_indices = @transform_1, window_bounds = array<i64: 64, 256>}, {transform_indices = @transform_2, window_bounds = array<i64: 1, 256>}, {transform_indices = @transform_3, window_bounds = array<i64: 1, 256>}, {transform_indices = @transform_4, window_bounds = array<i64: 16, 256>}]} {
    %c0_i32 = arith.constant 0 : i32
    %0 = arith.cmpi eq, %arg1, %c0_i32 : i32
    %1 = arith.extui %0 : i1 to i32
    %c0_i32_0 = arith.constant 0 : i32
    %2 = arith.cmpi ne, %1, %c0_i32_0 : i32
    scf.if %2 {
      %cst_10 = arith.constant 0.000000e+00 : f32
      %12 = vector.broadcast %cst_10 : f32 to vector<16x256xf32>
      %c0_11 = arith.constant 0 : index
      %c0_12 = arith.constant 0 : index
      %13 = vector.load %arg7[%c0_11, %c0_12] : memref<16x256xf32, #tpu.memory_space<vmem>>, vector<16x256xf32>
      tpu.vector_store %arg7[%c0_11, %c0_12], %12 {strides = array<i32>} : memref<16x256xf32, #tpu.memory_space<vmem>>, vector<16x256xf32>,
    } else {
    }
    %c0 = arith.constant 0 : index
    %c0_1 = arith.constant 0 : index
    %3 = vector.load %arg7[%c0, %c0_1] : memref<16x256xf32, #tpu.memory_space<vmem>>, vector<16x256xf32>
    %c0_2 = arith.constant 0 : index
    %c0_3 = arith.constant 0 : index
    %4 = vector.load %arg2[%c0_2, %c0_3] : memref<16x64xf32, #tpu.memory_space<vmem>>, vector<16x64xf32>
    %c0_4 = arith.constant 0 : index
    %c0_5 = arith.constant 0 : index
    %5 = vector.load %arg3[%c0_4, %c0_5] : memref<64x256xf32, #tpu.memory_space<vmem>>, vector<64x256xf32>
    %cst = arith.constant dense<0.000000e+00> : vector<16x256xf32>
    %6 = tpu.matmul %4, %5, %cst {dimension_numbers = #tpu.dot_dimension_numbers<[1], [0], [0], [1], [0, 0, 1, 1], [], []>} : vector<16x64xf32>, vector<64x256xf32>, vector<16x256xf32> -> vector<16x256xf32>
    %7 = arith.addf %3, %6 : vector<16x256xf32>
    %c0_6 = arith.constant 0 : index
    %c0_7 = arith.constant 0 : index
    %8 = vector.load %arg7[%c0_6, %c0_7] : memref<16x256xf32, #tpu.memory_space<vmem>>, vector<16x256xf32>
    tpu.vector_store %arg7[%c0_6, %c0_7], %7 {strides = array<i32>} : memref<16x256xf32, #tpu.memory_space<vmem>>, vector<16x256xf32>,
    %c0_i32_8 = arith.constant 0 : i32
    %9 = arith.cmpi eq, %arg1, %c0_i32_8 : i32
    %10 = arith.extui %9 : i1 to i32
    %c0_i32_9 = arith.constant 0 : i32
    %11 = arith.cmpi ne, %10, %c0_i32_9 : i32
    scf.if %11 {
      %c0_10 = arith.constant 0 : index
      %c0_11 = arith.constant 0 : index
      %12 = vector.load %arg7[%c0_10, %c0_11] : memref<16x256xf32, #tpu.memory_space<vmem>>, vector<16x256xf32>
      %cst_12 = arith.constant dense<0.000000e+00> : vector<256xf32>
      %13 = vector.multi_reduction <add>, %12, %cst_12 [0] : vector<16x256xf32> to vector<256xf32>
      %14 = vector.shape_cast %13 : vector<256xf32> to vector<1x256xf32>
      %cst_13 = arith.constant 6.250000e-02 : f32
      %15 = vector.broadcast %cst_13 : f32 to vector<1x256xf32>
      %16 = arith.mulf %14, %15 : vector<1x256xf32>
      %17 = arith.mulf %12, %12 : vector<16x256xf32>
      %cst_14 = arith.constant dense<0.000000e+00> : vector<256xf32>
      %18 = vector.multi_reduction <add>, %17, %cst_14 [0] : vector<16x256xf32> to vector<256xf32>
      %19 = vector.shape_cast %18 : vector<256xf32> to vector<1x256xf32>
      %cst_15 = arith.constant 6.250000e-02 : f32
      %20 = vector.broadcast %cst_15 : f32 to vector<1x256xf32>
      %21 = arith.mulf %19, %20 : vector<1x256xf32>
      %22 = arith.mulf %16, %16 : vector<1x256xf32>
      %23 = arith.subf %21, %22 : vector<1x256xf32>
      %cst_16 = arith.constant 0.000000e+00 : f32
      %24 = vector.broadcast %cst_16 : f32 to vector<1x256xf32>
      %25 = arith.maximumf %23, %24 : vector<1x256xf32>
      %c0_17 = arith.constant 0 : index
      %c0_18 = arith.constant 0 : index
      %26 = vector.load %arg4[%c0_17, %c0_18] : memref<1x256xf32, #tpu.memory_space<vmem>>, vector<1x256xf32>
      %cst_19 = arith.constant 9.99999974E-6 : f32
      %27 = vector.broadcast %cst_19 : f32 to vector<1x256xf32>
      %28 = arith.addf %25, %27 : vector<1x256xf32>
      %29 = math.rsqrt %28 : vector<1x256xf32>
      %30 = arith.mulf %26, %29 : vector<1x256xf32>
      %c0_20 = arith.constant 0 : index
      %c0_21 = arith.constant 0 : index
      %31 = vector.load %arg5[%c0_20, %c0_21] : memref<1x256xf32, #tpu.memory_space<vmem>>, vector<1x256xf32>
      %32 = arith.mulf %16, %30 : vector<1x256xf32>
      %33 = arith.subf %31, %32 : vector<1x256xf32>
      %34 = vector.broadcast %30 : vector<1x256xf32> to vector<16x256xf32>
      %35 = arith.mulf %12, %34 : vector<16x256xf32>
      %36 = vector.broadcast %33 : vector<1x256xf32> to vector<16x256xf32>
      %37 = arith.addf %35, %36 : vector<16x256xf32>
      %38 = arith.negf %37 : vector<16x256xf32>
      %39 = math.exp %38 : vector<16x256xf32>
      %cst_22 = arith.constant 1.000000e+00 : f32
      %40 = vector.broadcast %cst_22 : f32 to vector<16x256xf32>
      %41 = arith.addf %40, %39 : vector<16x256xf32>
      %42 = arith.divf %40, %41 : vector<16x256xf32>
      %43 = arith.mulf %37, %42 : vector<16x256xf32>
      %c0_23 = arith.constant 0 : index
      %c0_24 = arith.constant 0 : index
      %44 = vector.load %arg6[%c0_23, %c0_24] : memref<16x256xf32, #tpu.memory_space<vmem>>, vector<16x256xf32>
      tpu.vector_store %arg6[%c0_23, %c0_24], %43 {strides = array<i32>} : memref<16x256xf32, #tpu.memory_space<vmem>>, vector<16x256xf32>,
    } else {
    }
    return
  }
  func.func @transform_0(%arg0: i32, %arg1: i32) -> (i32, i32) {
    %c0_i32 = arith.constant 0 : i32
    %c0_i32_0 = arith.constant 0 : i32
    return %c0_i32, %arg1 : i32, i32
  }
  func.func @transform_1(%arg0: i32, %arg1: i32) -> (i32, i32) {
    %c0_i32 = arith.constant 0 : i32
    return %arg1, %arg0 : i32, i32
  }
  func.func @transform_2(%arg0: i32, %arg1: i32) -> (i32, i32) {
    %c0_i32 = arith.constant 0 : i32
    %c0_i32_0 = arith.constant 0 : i32
    return %c0_i32, %arg0 : i32, i32
  }
  func.func @transform_3(%arg0: i32, %arg1: i32) -> (i32, i32) {
    %c0_i32 = arith.constant 0 : i32
    %c0_i32_0 = arith.constant 0 : i32
    return %c0_i32, %arg0 : i32, i32
  }
  func.func @transform_4(%arg0: i32, %arg1: i32) -> (i32, i32) {
    %c0_i32 = arith.constant 0 : i32
    %c0_i32_0 = arith.constant 0 : i32
    return %c0_i32, %arg0 : i32, i32
  }
}

</mosaic_0001>

<llo_original>
// kernel: tpu_custom_call.1
$region0: #{tpu_custom_call.1}
  #allocation0 [shape = 'u32[]', space=smem, size = 0x4, offset = 0x4, fixed_abs, tag = 'smem constant byte address 0x4 - core index']
  #allocation1 [shape = 'u32[144,128]{1,0:T(1,128)}', space=vmem, size = 0x12000, scoped, tag = 'internal scratch']
  #allocation2 [shape = 'f32[16,256]{1,0:T(8,128)}', space=vmem, size = 0x4000, scoped, tag = 'scratch operand']
  %s0 = inlined_call_operand.hbm [shape: f32[16,64], index: 0, kind: input, shape index: {}]
  %s1 = inlined_call_operand.hbm [shape: f32[64,512], index: 1, kind: input, shape index: {}]
  %s2 = inlined_call_operand.hbm [shape: f32[1,512], index: 2, kind: input, shape index: {}]
  %s3 = inlined_call_operand.vmem [shape: f32[1,512], index: 3, kind: input, shape index: {}]
  %s4 = inlined_call_operand.hbm [shape: f32[16,512], index: 4, kind: output, shape index: {}]
  %s5 = sld [smem:[#allocation0]]
  $region69: #{tpu_custom_call.1} parent=0
    _
  %s7 = ssub.s32 1, %s5
  %s8 = scalar_select 0, %s7, %s5
  $region1: #{tpu_custom_call.1} parent=0
    #allocation3 [shape = 'u8[8192]{0}', space=vmem, size = 0x2000, scoped, tag = 'input window, operand 0, single buffered']
    #allocation4 [shape = 's32[2]{0}', space=sflag, size = 0x8, scoped, tag = 'scoped memory for tpu_custom_call.1']
    #allocation5 [shape = 's32[2]{0}', space=sflag, size = 0x8, scoped, tag = 'scoped memory for tpu_custom_call.1']
    #allocation6 [shape = 'u8[131072]{0}', space=vmem, size = 0x20000, scoped, tag = 'input window, operand 1']
    #allocation7 [shape = 's32[2]{0}', space=sflag, size = 0x8, scoped, tag = 'scoped memory for tpu_custom_call.1']
    #allocation8 [shape = 'u8[2048]{0}', space=vmem, size = 0x800, scoped, tag = 'input window, operand 2']
    #allocation9 [shape = 'u8[32768]{0}', space=vmem, size = 0x8000, scoped, tag = 'output window, operand 0']
    %9 = vsyncpa [#allocation4], 0
    %10 = vsyncpa [#allocation7], 0
    %s11 = scalar_lea.sflag [#allocation7], 1
    %12 = vsyncpa %s11, 0
    %13 = vsyncpa [#allocation5], 0
    %s14 = scalar_lea.sflag [#allocation5], 1
    %15 = vsyncpa %s14, 0
    loop: start=0, step=1, limit=4
    $region2: #{tpu_custom_call.1} parent=1 // loop_pre_header
      _
    $region3: #{tpu_custom_call.1} parent=1 // loop_header
      %s17 = sphi 0, %s21
      %p18 = scmp.ge.s32.totalorder %s17, 4
      %s24 = sphi 0, %s36
      %s25 = sphi 0, %s32
      %s26 = sphi 0, %s24
      %s27 = sphi 0, %s25
      %s28 = sphi 0, %s26
      %s29 = sphi 0, %s27
      %s39 = sphi 0, %s41
      %s42 = sphi 0, %s39
      %s43 = sphi 0, %s42
      %s59 = sphi 0, %s43
      %s67 = sphi 0, %s69
      %s70 = sphi 0, %s67
      %s71 = sphi 0, %s70
      %s87 = sphi 0, %s71
      %s93 = sphi 0, %s95
      %s96 = sphi 0, %s93
      %s97 = sphi 0, %s96
      %s113 = sphi 0, %s97
      %s119 = sphi 0, %s121
      %s122 = sphi 0, %s119
      %s123 = sphi 0, %s122
      %s139 = sphi 0, %s123
      %s145 = sphi 0, %s147
      %s148 = sphi 0, %s145
      %s149 = sphi 0, %s148
      %s165 = sphi 0, %s149
    $region4: #{tpu_custom_call.1} parent=1 // loop_header_branch
      %20 = sbr.rel (%p18) target = $region8
    $region5: #{tpu_custom_call.1} parent=1 // loop_body
      %s22 = ssub.s32 %s17, 1
      %s23 = ssub.s32 %s17, 2
      %s30 = sadd.s32 1, %s25
      %p31 = scmp.ge.s32.totalorder %s30, 1
      %s32 = scalar_select %p31, 0, %s30
      %s33 = sadd.s32 1, %s24
      %s34 = scalar_select %p31, %s33, %s24
      %p35 = scmp.ge.s32.totalorder %s34, 2
      %s36 = scalar_select %p35, 0, %s34
      %s37 = ssub.s32 %s25, %s32
      %p38 = scmp.eq.s32.totalorder %s37, 0
      %s40 = sadd.s32 %s39, 1
      %s41 = scalar_select %p38, %s39, %s40
      %p44 = pneg %p38
      %p45 = scmp.eq.s32.totalorder %s17, 1
      %p46 = por %p44, %p45
      %p47 = scmp.ne.s32.totalorder %s39, %s42
      %p48 = scmp.eq.s32.totalorder %s17, 0
      %p49 = por %p47, %p48
      %p50 = scmp.ne.s32.totalorder %s39, %s42
      %p51 = scmp.eq.s32.totalorder %s22, 1
      %p52 = por %p50, %p51
      %p53 = scmp.ne.s32.totalorder %s42, %s43
      %p54 = scmp.eq.s32.totalorder %s22, 0
      %p55 = por %p53, %p54
      %p56 = scmp.ne.s32.totalorder %s42, %s43
      %p57 = scmp.eq.s32.totalorder %s23, 1
      %p58 = por %p56, %p57
      %p60 = scmp.ne.s32.totalorder %s43, %s59
      %p61 = scmp.eq.s32.totalorder %s23, 0
      %p62 = por %p60, %p61
      %s63 = ssub.s32 %s25, %s32
      %s64 = ssub.s32 %s24, %s36
      %s65 = sor.u32 %s63, %s64
      %p66 = scmp.eq.s32.totalorder %s65, 0
      %s68 = sadd.s32 %s67, 1
      %s69 = scalar_select %p66, %s67, %s68
      %p72 = pneg %p66
      %p73 = scmp.eq.s32.totalorder %s17, 1
      %p74 = por %p72, %p73
      %p75 = scmp.ne.s32.totalorder %s67, %s70
      %p76 = scmp.eq.s32.totalorder %s17, 0
      %p77 = por %p75, %p76
      %p78 = scmp.ne.s32.totalorder %s67, %s70
      %p79 = scmp.eq.s32.totalorder %s22, 1
      %p80 = por %p78, %p79
      %p81 = scmp.ne.s32.totalorder %s70, %s71
      %p82 = scmp.eq.s32.totalorder %s22, 0
      %p83 = por %p81, %p82
      %p84 = scmp.ne.s32.totalorder %s70, %s71
      %p85 = scmp.eq.s32.totalorder %s23, 1
      %p86 = por %p84, %p85
      %p88 = scmp.ne.s32.totalorder %s71, %s87
      %p89 = scmp.eq.s32.totalorder %s23, 0
      %p90 = por %p88, %p89
      %s91 = ssub.s32 %s24, %s36
      %p92 = scmp.eq.s32.totalorder %s91, 0
      %s94 = sadd.s32 %s93, 1
      %s95 = scalar_select %p92, %s93, %s94
      %p98 = pneg %p92
      %p99 = scmp.eq.s32.totalorder %s17, 1
      %p100 = por %p98, %p99
      %p101 = scmp.ne.s32.totalorder %s93, %s96
      %p102 = scmp.eq.s32.totalorder %s17, 0
      %p103 = por %p101, %p102
      %p104 = scmp.ne.s32.totalorder %s93, %s96
      %p105 = scmp.eq.s32.totalorder %s22, 1
      %p106 = por %p104, %p105
      %p107 = scmp.ne.s32.totalorder %s96, %s97
      %p108 = scmp.eq.s32.totalorder %s22, 0
      %p109 = por %p107, %p108
      %p110 = scmp.ne.s32.totalorder %s96, %s97
      %p111 = scmp.eq.s32.totalorder %s23, 1
      %p112 = por %p110, %p111
      %p114 = scmp.ne.s32.totalorder %s97, %s113
      %p115 = scmp.eq.s32.totalorder %s23, 0
      %p116 = por %p114, %p115
      %s117 = ssub.s32 %s24, %s36
      %p118 = scmp.eq.s32.totalorder %s117, 0
      %s120 = sadd.s32 %s119, 1
      %s121 = scalar_select %p118, %s119, %s120
      %p124 = pneg %p118
      %p125 = scmp.eq.s32.totalorder %s17, 1
      %p126 = por %p124, %p125
      %p127 = scmp.ne.s32.totalorder %s119, %s122
      %p128 = scmp.eq.s32.totalorder %s17, 0
      %p129 = por %p127, %p128
      %p130 = scmp.ne.s32.totalorder %s119, %s122
      %p131 = scmp.eq.s32.totalorder %s22, 1
      %p132 = por %p130, %p131
      %p133 = scmp.ne.s32.totalorder %s122, %s123
      %p134 = scmp.eq.s32.totalorder %s22, 0
      %p135 = por %p133, %p134
      %p136 = scmp.ne.s32.totalorder %s122, %s123
      %p137 = scmp.eq.s32.totalorder %s23, 1
      %p138 = por %p136, %p137
      %p140 = scmp.ne.s32.totalorder %s123, %s139
      %p141 = scmp.eq.s32.totalorder %s23, 0
      %p142 = por %p140, %p141
      %s143 = ssub.s32 %s24, %s36
      %p144 = scmp.eq.s32.totalorder %s143, 0
      %s146 = sadd.s32 %s145, 1
      %s147 = scalar_select %p144, %s145, %s146
      %p150 = pneg %p144
      %p151 = scmp.eq.s32.totalorder %s17, 1
      %p152 = por %p150, %p151
      %p153 = scmp.ne.s32.totalorder %s145, %s148
      %p154 = scmp.eq.s32.totalorder %s17, 0
      %p155 = por %p153, %p154
      %p156 = scmp.ne.s32.totalorder %s145, %s148
      %p157 = scmp.eq.s32.totalorder %s22, 1
      %p158 = por %p156, %p157
      %p159 = scmp.ne.s32.totalorder %s148, %s149
      %p160 = scmp.eq.s32.totalorder %s22, 0
      %p161 = por %p159, %p160
      %p162 = scmp.ne.s32.totalorder %s148, %s149
      %p163 = scmp.eq.s32.totalorder %s23, 1
      %p164 = por %p162, %p163
      %p166 = scmp.ne.s32.totalorder %s149, %s165
      %p167 = scmp.eq.s32.totalorder %s23, 0
      %p168 = por %p166, %p167
      %p169 = scmp.le.s32.totalorder 1, %s17
      %p170 = scmp.lt.s32.totalorder %s17, 3
      %p171 = pnand %p169, %p170
      %p172 = pneg %p171
      // Predicated region
      $region9: #{tpu_custom_call.1} parent=5 // pred_check
        _
      $region10: #{tpu_custom_call.1} parent=5 // pred_check_branch
        %174 = sbr.rel (%p171) target = $region12
      $region11: #{tpu_custom_call.1} parent=5 // pred_region
        %s175 = ssub.s32 %s17, 1
        // Predicated region
        $region13: #{tpu_custom_call.1} parent=11 // pred_check
          %p176 = pneg %p55
        $region14: #{tpu_custom_call.1} parent=11 // pred_check_branch
          %178 = sbr.rel (%p176) target = $region16
        $region15: #{tpu_custom_call.1} parent=11 // pred_region
          %s180 = ssub.s32 256, 256
          %181 = vsyncadd [#allocation4], %s180
          %s182 = smul.addr %s27, 128
          %s183 = scalar_lea.hbm %s0, %s182
          %s184 = sshll.u32 [#allocation3], 4
          %s185 = int_to_ptr.vmem [resolvable:$true] %s184
          %190 = dma.hbm_to_vmem [thread:$0]  %s183, 256, %s185, [#allocation4], 128, 128, 8
        $region16: #{tpu_custom_call.1} parent=11 // pred_fallthru
          _
      $region12: #{tpu_custom_call.1} parent=5 // pred_fallthru
        _
      %p191 = scmp.lt.s32.totalorder %s17, 2
      // Predicated region
      $region17: #{tpu_custom_call.1} parent=5 // pred_check
        %p192 = pneg %p191
      $region18: #{tpu_custom_call.1} parent=5 // pred_check_branch
        %194 = sbr.rel (%p192) target = $region20
      $region19: #{tpu_custom_call.1} parent=5 // pred_region
        // Predicated region
        $region21: #{tpu_custom_call.1} parent=19 // pred_check
          %p195 = pneg %p77
        $region22: #{tpu_custom_call.1} parent=19 // pred_check_branch
          %197 = sbr.rel (%p195) target = $region24
        $region23: #{tpu_custom_call.1} parent=19 // pred_region
          %s198 = sand.u32 %s17, 1
          %s199 = scalar_lea.sflag [#allocation7], %s198
          %s200 = sand.u32 %s67, 1
          %s201 = smul.addr %s200, 128
          %s202 = scalar_lea.vmem [#allocation6], %s201
          %s203 = smul.u32 8, %s25
          %s204 = smul.u32 2, %s24
          %s206 = ssub.s32 2048, 2048
          %207 = vsyncadd %s199, %s206
          %s208 = smul.addr %s203, 4
          %s209 = sadd.s32 %s204, %s208
          %s210 = smul.addr %s209, 128
          %s211 = scalar_lea.hbm %s1, %s210
          %s212 = sshll.u32 %s202, 4
          %s213 = int_to_ptr.vmem [resolvable:$true] %s212
          %218 = dma.hbm_to_vmem [thread:$0]  %s211, 2048, %s213, %s199, 512, 256, 16
        $region24: #{tpu_custom_call.1} parent=19 // pred_fallthru
          _
        // Predicated region
        $region25: #{tpu_custom_call.1} parent=19 // pred_check
          %p219 = pneg %p103
        $region26: #{tpu_custom_call.1} parent=19 // pred_check_branch
          %221 = sbr.rel (%p219) target = $region28
        $region27: #{tpu_custom_call.1} parent=19 // pred_region
          %s222 = sand.u32 %s17, 1
          %s223 = scalar_lea.sflag [#allocation7], %s222
          %s224 = sand.u32 %s93, 1
          %s225 = smul.addr %s224, 2
          %s226 = scalar_lea.vmem [#allocation8], %s225
          %s227 = smul.u32 2, %s24
          %s229 = ssub.s32 32, 32
          %230 = vsyncadd %s223, %s229
          %s231 = smul.addr %s227, 16
          %s232 = scalar_lea.hbm %s2, %s231
          %s234 = sshll.u32 %s226, 4
          %s235 = int_to_ptr.vmem [resolvable:$true] %s234
          %237 = dma.hbm_to_vmem [thread:$0]  %s232, 32, %s235, %s223
        $region28: #{tpu_custom_call.1} parent=19 // pred_fallthru
          _
        // Predicated region
        $region29: #{tpu_custom_call.1} parent=19 // pred_check
          %p238 = pneg %p129
        $region30: #{tpu_custom_call.1} parent=19 // pred_check_branch
          %240 = sbr.rel (%p238) target = $region32
        $region31: #{tpu_custom_call.1} parent=19 // pred_region
          %s241 = smul.u32 2, %s24
          %p242 = scmp.lt.s32.totalorder %s241, 3
          %s243 = scalar_select %p242, %s241, 3
          %s244 = scalar_lea.vmem %s3, %s243
          %s245 = smul.u32 2, %s24
        $region32: #{tpu_custom_call.1} parent=19 // pred_fallthru
          _
      $region20: #{tpu_custom_call.1} parent=5 // pred_fallthru
        _
      %p246 = scmp.le.s32.totalorder 1, %s17
      %p247 = scmp.lt.s32.totalorder %s17, 3
      %p248 = pnand %p246, %p247
      %p249 = pneg %p248
      // Predicated region
      $region33: #{tpu_custom_call.1} parent=5 // pred_check
        _
      $region34: #{tpu_custom_call.1} parent=5 // pred_check_branch
        %251 = sbr.rel (%p248) target = $region36
      $region35: #{tpu_custom_call.1} parent=5 // pred_region
        %s252 = ssub.s32 %s17, 1
        // Predicated region
        $region37: #{tpu_custom_call.1} parent=35 // pred_check
          %p253 = pneg %p55
        $region38: #{tpu_custom_call.1} parent=35 // pred_check_branch
          %255 = sbr.rel (%p253) target = $region40
        $region39: #{tpu_custom_call.1} parent=35 // pred_region
          %256 = dma.done [#allocation4], 256
        $region40: #{tpu_custom_call.1} parent=35 // pred_fallthru
          _
        %s257 = sand.u32 %s22, 1
        %s258 = scalar_lea.sflag [#allocation7], %s257
        %s259 = sand.u32 %s70, 1
        %s260 = smul.addr %s259, 128
        %s261 = scalar_lea.vmem [#allocation6], %s260
        // Predicated region
        $region41: #{tpu_custom_call.1} parent=35 // pred_check
          %p262 = pneg %p83
        $region42: #{tpu_custom_call.1} parent=35 // pred_check_branch
          %264 = sbr.rel (%p262) target = $region44
        $region43: #{tpu_custom_call.1} parent=35 // pred_region
          %265 = dma.done %s258, 2048
        $region44: #{tpu_custom_call.1} parent=35 // pred_fallthru
          _
        %s266 = sand.u32 %s22, 1
        %s267 = scalar_lea.sflag [#allocation7], %s266
        %s268 = sand.u32 %s96, 1
        %s269 = smul.addr %s268, 2
        %s270 = scalar_lea.vmem [#allocation8], %s269
        // Predicated region
        $region45: #{tpu_custom_call.1} parent=35 // pred_check
          %p271 = pneg %p109
        $region46: #{tpu_custom_call.1} parent=35 // pred_check_branch
          %273 = sbr.rel (%p271) target = $region48
        $region47: #{tpu_custom_call.1} parent=35 // pred_region
          %274 = dma.done %s267, 32
        $region48: #{tpu_custom_call.1} parent=35 // pred_fallthru
          _
        %p275 = pneg %p55
        %p276 = pneg %p52
        %s277 = sand.u32 %s22, 1
        %s278 = scalar_lea.sflag [#allocation7], %s277
        %s279 = sand.u32 %s70, 1
        %s280 = smul.addr %s279, 128
        %s281 = scalar_lea.vmem [#allocation6], %s280
        %p282 = pneg %p83
        %p283 = pneg %p80
        %s284 = sand.u32 %s22, 1
        %s285 = scalar_lea.sflag [#allocation7], %s284
        %s286 = sand.u32 %s96, 1
        %s287 = smul.addr %s286, 2
        %s288 = scalar_lea.vmem [#allocation8], %s287
        %p289 = pneg %p109
        %p290 = pneg %p106
        %s291 = smul.u32 2, %s26
        %p292 = scmp.lt.s32.totalorder %s291, 3
        %s293 = scalar_select %p292, %s291, 3
        %s294 = scalar_lea.vmem %s3, %s293
        %p295 = pneg %p135
        %p296 = pneg %p132
        %p297 = pneg %p161
        %p298 = pneg %p158
        %s299 = sand.u32 %s148, 1
        %s300 = scalar_lea.sflag [#allocation5], %s299
        %s301 = sand.u32 %s148, 1
        %s302 = smul.addr %s301, 32
        %s303 = scalar_lea.vmem [#allocation9], %s302
        %s304 = smul.u32 8, %s27
        %s305 = smul.u32 2, %s26
        %s306 = smul.u32 2, %s26
        %s307 = smul.u32 2, %s26
        %p308 = scmp.lt.s32.totalorder %s307, 3
        %s309 = scalar_select %p308, %s307, 3
        %s310 = scalar_lea.vmem %s3, %s309
        %s311 = smul.u32 2, %s26
        %s312 = smul.u32 2, %s26
        %p313 = scmp.eq.s32.totalorder %s27, 0
        // Predicated region
        $region49: #{tpu_custom_call.1} parent=35 // pred_check
          %p314 = pneg %p313
        $region50: #{tpu_custom_call.1} parent=35 // pred_check_branch
          %316 = sbr.rel (%p314) target = $region52
        $region51: #{tpu_custom_call.1} parent=35 // pred_region
          %317 = vst [vmem:[#allocation2] sm:$0xff] 0.0
          %318 = vst [vmem:[#allocation2 + $0x8] sm:$0xff] 0.0
          %319 = vst [vmem:[#allocation2 + $0x10] sm:$0xff] 0.0
          %320 = vst [vmem:[#allocation2 + $0x18] sm:$0xff] 0.0
        $region52: #{tpu_custom_call.1} parent=35 // pred_fallthru
          _
        %v321 = vld [vmem:[#allocation2] sm:$0xff]
        %v322 = vld [vmem:[#allocation2 + $0x8] sm:$0xff]
        %v323 = vld [vmem:[#allocation2 + $0x10] sm:$0xff]
        %v324 = vld [vmem:[#allocation2 + $0x18] sm:$0xff]
        %v325 = vld [vmem:[#allocation3] sm:$0xff]
        %v326 = vld [vmem:[#allocation3 + $0x8] sm:$0xff]
        %v327 = vld [vmem:[%s261] sm:$0xff]
        %v328 = vld [vmem:[%s261 + $0x8] sm:$0xff]
        %v329 = vld [vmem:[%s261 + $0x10] sm:$0xff]
        %v330 = vld [vmem:[%s261 + $0x18] sm:$0xff]
        %v331 = vld [vmem:[%s261 + $0x20] sm:$0xff]
        %v332 = vld [vmem:[%s261 + $0x28] sm:$0xff]
        %v333 = vld [vmem:[%s261 + $0x30] sm:$0xff]
        %v334 = vld [vmem:[%s261 + $0x38] sm:$0xff]
        %v335 = vld [vmem:[%s261 + $0x40] sm:$0xff]
        %v336 = vld [vmem:[%s261 + $0x48] sm:$0xff]
        %v337 = vld [vmem:[%s261 + $0x50] sm:$0xff]
        %v338 = vld [vmem:[%s261 + $0x58] sm:$0xff]
        %v339 = vld [vmem:[%s261 + $0x60] sm:$0xff]
        %v340 = vld [vmem:[%s261 + $0x68] sm:$0xff]
        %v341 = vld [vmem:[%s261 + $0x70] sm:$0xff]
        %v342 = vld [vmem:[%s261 + $0x78] sm:$0xff]
        %vm343 = vcmask 523264
        %v345 = vsel %vm343, %v325, 0
        %v348 = vsel %vm343, %v326, 0
        %350 = vmatprep.subr.mxu0 0.0
        %351 = vmatpush1.msra.mxu0 0.0
        %352 = vmatprep.subr.mxu0 0.0
        %353 = vmatpush1.msra.mxu0 0.0
        %354 = vmatprep.subr.mxu0 0.0
        %355 = vmatpush1.msra.mxu0 0.0
        %356 = vmatprep.subr.mxu0 0.0
        %357 = vmatpush1.msra.mxu0 0.0
        %358 = vmatprep.subr.mxu0 0.0
        %359 = vmatpush1.msra.mxu0 0.0
        %360 = vmatprep.subr.mxu0 0.0
        %361 = vmatpush1.msra.mxu0 0.0
        %362 = vmatprep.subr.mxu0 0.0
        %363 = vmatpush1.msra.mxu0 0.0
        %364 = vmatprep.subr.mxu0 0.0
        %365 = vmatpush1.msra.mxu0 0.0
        %366 = vmatprep.subr.mxu0 %v342
        %367 = vmatpush1.msra.mxu0 %v341
        %368 = vmatprep.subr.mxu0 %v340
        %369 = vmatpush1.msra.mxu0 %v339
        %370 = vmatprep.subr.mxu0 %v338
        %371 = vmatpush1.msra.mxu0 %v337
        %372 = vmatprep.subr.mxu0 %v336
        %373 = vmatpush1.msra.mxu0 %v335
        %374 = vmatprep.subr.mxu0 %v334
        %375 = vmatpush1.msra.mxu0 %v333
        %376 = vmatprep.subr.mxu0 %v332
        %377 = vmatpush1.msra.mxu0 %v331
        %378 = vmatprep.subr.mxu0 %v330
        %379 = vmatpush1.msra.mxu0 %v329
        %380 = vmatprep.subr.mxu0 %v328
        %381 = vmatpush1.msra.mxu0 %v327
        %382 = vmatprep.subr.mxu0 0.0
        %383 = vmatpush2.msra.mxu0 0.0
        %384 = vmatprep.subr.mxu0 0.0
        %385 = vmatpush2.msra.mxu0 0.0
        %386 = vmatprep.subr.mxu0 0.0
        %387 = vmatpush2.msra.mxu0 0.0
        %388 = vmatprep.subr.mxu0 0.0
        %389 = vmatpush2.msra.mxu0 0.0
        %390 = vmatprep.subr.mxu0 0.0
        %391 = vmatpush2.msra.mxu0 0.0
        %392 = vmatprep.subr.mxu0 0.0
        %393 = vmatpush2.msra.mxu0 0.0
        %394 = vmatprep.subr.mxu0 0.0
        %395 = vmatpush2.msra.mxu0 0.0
        %396 = vmatprep.subr.mxu0 0.0
        %397 = vmatpush2.msra.mxu0 0.0
        %398 = vmatprep.subr.mxu0 0.0
        %399 = vmatpush2.msra.mxu0 0.0
        %400 = vmatprep.subr.mxu0 0.0
        %401 = vmatpush2.msra.mxu0 0.0
        %402 = vmatprep.subr.mxu0 0.0
        %403 = vmatpush2.msra.mxu0 0.0
        %404 = vmatprep.subr.mxu0 0.0
        %405 = vmatpush2.msra.mxu0 0.0
        %406 = vmatprep.subr.mxu0 0.0
        %407 = vmatpush2.msra.mxu0 0.0
        %408 = vmatprep.subr.mxu0 0.0
        %409 = vmatpush2.msra.mxu0 0.0
        %410 = vmatprep.subr.mxu0 0.0
        %411 = vmatpush2.msra.mxu0 0.0
        %412 = vmatprep.subr.mxu0 0.0
        %413 = vmatpush2.msra.mxu0 0.0
        %414 = vmatprep.mubr.f32.mxu0 0.0
        %415 = vmatmul.mubr.f32.gmra.mxu0 %v345
        %v416 = vpop.f32.mrf.mxu0
        %v417 = vadd.f32 0.0, %v416
        %v418 = vpop.f32.mrf.mxu0
        %v419 = vadd.f32 0.0, %v418
        %420 = vmatprep.mubr.f32.mxu0 0.0
        %421 = vmatmul.mubr.f32.gmra.mxu0 %v348
        %v422 = vpop.f32.mrf.mxu0
        %v423 = vadd.f32 0.0, %v422
        %v424 = vpop.f32.mrf.mxu0
        %v425 = vadd.f32 0.0, %v424
        %426 = vdwg.mxu0
        %v427 = vadd.f32 %v321, %v417
        %v428 = vadd.f32 %v322, %v419
        %v429 = vadd.f32 %v323, %v423
        %v430 = vadd.f32 %v324, %v425
        %431 = vst [vmem:[#allocation2] sm:$0xff] %v427
        %432 = vst [vmem:[#allocation2 + $0x8] sm:$0xff] %v428
        %433 = vst [vmem:[#allocation2 + $0x10] sm:$0xff] %v429
        %434 = vst [vmem:[#allocation2 + $0x18] sm:$0xff] %v430
        // Predicated region
        $region53: #{tpu_custom_call.1} parent=35 // pred_check
          %p435 = pneg %p313
        $region54: #{tpu_custom_call.1} parent=35 // pred_check_branch
          %437 = sbr.rel (%p435) target = $region56
        $region55: #{tpu_custom_call.1} parent=35 // pred_region
          %v438 = vld [vmem:[#allocation2] sm:$0xff]
          %v439 = vld [vmem:[#allocation2 + $0x8] sm:$0xff]
          %v440 = vld [vmem:[#allocation2 + $0x10] sm:$0xff]
          %v441 = vld [vmem:[#allocation2 + $0x18] sm:$0xff]
          %v442 = vadd.f32 %v438, %v440
          %v443 = vrot.slane %v442, 4
          %v444 = vadd.f32 %v442, %v443
          %v445 = vrot.slane %v444, 2
          %v446 = vadd.f32 %v444, %v445
          %v447 = vrot.slane %v446, 1
          %v448 = vadd.f32 %v446, %v447
          %v449 = vadd.f32 %v439, %v441
          %v450 = vrot.slane %v449, 4
          %v451 = vadd.f32 %v449, %v450
          %v452 = vrot.slane %v451, 2
          %v453 = vadd.f32 %v451, %v452
          %v454 = vrot.slane %v453, 1
          %v455 = vadd.f32 %v453, %v454
          %v456 = vmul.f32 %v448, 0.0625
          %v457 = vmul.f32 %v455, 0.0625
          %v458 = vmul.f32 %v438, %v438
          %v459 = vmul.f32 %v439, %v439
          %v460 = vmul.f32 %v440, %v440
          %v461 = vmul.f32 %v441, %v441
          %v462 = vadd.f32 %v458, %v460
          %v463 = vrot.slane %v462, 4
          %v464 = vadd.f32 %v462, %v463
          %v465 = vrot.slane %v464, 2
          %v466 = vadd.f32 %v464, %v465
          %v467 = vrot.slane %v466, 1
          %v468 = vadd.f32 %v466, %v467
          %v469 = vadd.f32 %v459, %v461
          %v470 = vrot.slane %v469, 4
          %v471 = vadd.f32 %v469, %v470
          %v472 = vrot.slane %v471, 2
          %v473 = vadd.f32 %v471, %v472
          %v474 = vrot.slane %v473, 1
          %v475 = vadd.f32 %v473, %v474
          %v476 = vmul.f32 %v468, 0.0625
          %v477 = vmul.f32 %v475, 0.0625
          %v478 = vmul.f32 %v456, %v456
          %v479 = vmul.f32 %v457, %v457
          %v480 = vsub.f32 %v476, %v478
          %v481 = vsub.f32 %v477, %v479
          %v482 = vmax.f32 %v480, 0.0
          %v483 = vmax.f32 %v481, 0.0
          %v484 = vld [vmem:[%s270] sm:$0x3]
          %v485 = vadd.f32 %v482, 1e-05
          %v486 = vadd.f32 %v483, 1e-05
          %v487 = vrsqrt.pop %v485
          %v488 = vrsqrt.pop %v486
          %v491 = vcombine.low %v487, %v488
          %v493 = vunpack.c.l.s4 1966171168
          %v494 = vunpack.c.0.s8 %v493
          %v495 = vlaneseq
          %v496 = vshrl.u32 %v495, 7
          %v497 = vsub.s32 %v494, %v496
          %v498 = vrot.slane %v491, %v497
          %v500 = vunpack.c.l.s4 1966171168
          %v501 = vunpack.c.0.s8 %v500
          %v502 = vlaneseq
          %v503 = vshrl.u32 %v502, 7
          %v504 = vsub.s32 %v501, %v503
          %v505 = vrot.slane %v498, %v504
          %v507 = vmul.f32 %v484, %v505
          %v508 = vld [vmem:[%s310] sm:$0x3]
          %v510 = vlaneseq
          %v511 = vshrl.u32 %v510, 7
          %v512 = vsub.s32 0, %v511
          %v513 = vrot.slane %v507, %v512
          %v514 = vlaneseq
          %v515 = vshrl.u32 %v514, 7
          %v516 = vsub.s32 1, %v515
          %v517 = vrot.slane %v507, %v516
          %v520 = vmul.f32 %v456, %v513
          %v521 = vmul.f32 %v457, %v517
          %v524 = vcombine.low %v520, %v521
          %v526 = vunpack.c.l.s4 1966171168
          %v527 = vunpack.c.0.s8 %v526
          %v528 = vlaneseq
          %v529 = vshrl.u32 %v528, 7
          %v530 = vsub.s32 %v527, %v529
          %v531 = vrot.slane %v524, %v530
          %v533 = vunpack.c.l.s4 1966171168
          %v534 = vunpack.c.0.s8 %v533
          %v535 = vlaneseq
          %v536 = vshrl.u32 %v535, 7
          %v537 = vsub.s32 %v534, %v536
          %v538 = vrot.slane %v531, %v537
          %v540 = vsub.f32 %v508, %v538
          %v541 = vmul.f32 %v438, %v513
          %v542 = vmul.f32 %v439, %v517
          %v543 = vmul.f32 %v440, %v513
          %v544 = vmul.f32 %v441, %v517
          %v546 = vlaneseq
          %v547 = vshrl.u32 %v546, 7
          %v548 = vsub.s32 0, %v547
          %v549 = vrot.slane %v540, %v548
          %v550 = vlaneseq
          %v551 = vshrl.u32 %v550, 7
          %v552 = vsub.s32 1, %v551
          %v553 = vrot.slane %v540, %v552
          %v556 = vadd.f32 %v541, %v549
          %v557 = vadd.f32 %v542, %v553
          %v558 = vadd.f32 %v543, %v549
          %v559 = vadd.f32 %v544, %v553
          %v560 = vxor.u32 %v556, 2147483648
          %v561 = vxor.u32 %v557, 2147483648
          %v562 = vxor.u32 %v558, 2147483648
          %v563 = vxor.u32 %v559, 2147483648
          %v564 = vmul.f32 %v560, 1.442695
          %v565 = vpow.pop %v564
          %v566 = vmul.f32 %v561, 1.442695
          %v567 = vpow.pop %v566
          %v568 = vmul.f32 %v562, 1.442695
          %v569 = vpow.pop %v568
          %v570 = vmul.f32 %v563, 1.442695
          %v571 = vpow.pop %v570
          %v572 = vadd.f32 %v565, 1.0
          %v573 = vadd.f32 %v567, 1.0
          %v574 = vadd.f32 %v569, 1.0
          %v575 = vadd.f32 %v571, 1.0
          %v576 = vrcp.pop %v572
          %v577 = vmul.f32 1.0, %v576
          %v578 = vrcp.pop %v573
          %v579 = vmul.f32 1.0, %v578
          %v580 = vrcp.pop %v574
          %v581 = vmul.f32 1.0, %v580
          %v582 = vrcp.pop %v575
          %v583 = vmul.f32 1.0, %v582
          %v584 = vmul.f32 %v556, %v577
          %v585 = vmul.f32 %v557, %v579
          %v586 = vmul.f32 %v558, %v581
          %v587 = vmul.f32 %v559, %v583
          %588 = vst [vmem:[%s303] sm:$0xff] %v584
          %589 = vst [vmem:[%s303 + $0x8] sm:$0xff] %v585
          %590 = vst [vmem:[%s303 + $0x10] sm:$0xff] %v586
          %591 = vst [vmem:[%s303 + $0x18] sm:$0xff] %v587
        $region56: #{tpu_custom_call.1} parent=35 // pred_fallthru
          _
        %s592 = sand.u32 %s148, 1
        %s593 = scalar_lea.sflag [#allocation5], %s592
        %s594 = sand.u32 %s148, 1
        %s595 = smul.addr %s594, 32
        %s596 = scalar_lea.vmem [#allocation9], %s595
        // Predicated region
        $region57: #{tpu_custom_call.1} parent=35 // pred_check
          %p597 = pneg %p158
        $region58: #{tpu_custom_call.1} parent=35 // pred_check_branch
          %599 = sbr.rel (%p597) target = $region60
        $region59: #{tpu_custom_call.1} parent=35 // pred_region
          %s600 = smul.u32 2, %s26
          %s602 = ssub.s32 512, 512
          %603 = vsyncadd %s593, %s602
          %s604 = smul.addr %s600, 128
          %s605 = scalar_lea.hbm %s4, %s604
          %s606 = sshll.u32 %s596, 4
          %s607 = int_to_ptr.vmem [resolvable:$true] %s606
          %612 = dma.vmem_to_hbm [thread:$0]  %s607, 512, %s605, %s593, 256, 512, 16
        $region60: #{tpu_custom_call.1} parent=35 // pred_fallthru
          _
      $region36: #{tpu_custom_call.1} parent=5 // pred_fallthru
        _
      %p613 = scmp.le.s32.totalorder 2, %s17
      // Predicated region
      $region61: #{tpu_custom_call.1} parent=5 // pred_check
        %p614 = pneg %p613
      $region62: #{tpu_custom_call.1} parent=5 // pred_check_branch
        %616 = sbr.rel (%p614) target = $region64
      $region63: #{tpu_custom_call.1} parent=5 // pred_region
        %s617 = ssub.s32 %s17, 2
        // Predicated region
        $region65: #{tpu_custom_call.1} parent=63 // pred_check
          %p618 = pneg %p164
        $region66: #{tpu_custom_call.1} parent=63 // pred_check_branch
          %620 = sbr.rel (%p618) target = $region68
        $region67: #{tpu_custom_call.1} parent=63 // pred_region
          %s621 = sand.u32 %s149, 1
          %s622 = scalar_lea.sflag [#allocation5], %s621
          %s623 = sand.u32 %s149, 1
          %s624 = smul.addr %s623, 32
          %s625 = scalar_lea.vmem [#allocation9], %s624
          %626 = dma.done %s622, 512
        $region68: #{tpu_custom_call.1} parent=63 // pred_fallthru
          _
      $region64: #{tpu_custom_call.1} parent=5 // pred_fallthru
        _
    $region6: #{tpu_custom_call.1} parent=1 // loop_footer
      %s21 = sadd.s32 1, %s17
    $region7: #{tpu_custom_call.1} parent=1 // loop_footer_branch
      %16 = sbr.rel target = $region3
    $region8: #{tpu_custom_call.1} parent=1 // loop_exit
      _
    %627 = vsyncpa [#allocation4], 1
    %s628 = scalar_lea.sflag [#allocation4], 1
    %629 = vsyncpa %s628, 1
    %630 = vsyncpa [#allocation7], 1
    %s631 = scalar_lea.sflag [#allocation7], 1
    %632 = vsyncpa %s631, 1
    %633 = vsyncpa [#allocation5], 1
    %s634 = scalar_lea.sflag [#allocation5], 1
    %635 = vsyncpa %s634, 1

</llo_original>
